<compile_context>
chip_gen: v7x
topology: tpu7x:2x2x1
jax: 0.10.0
libtpu: 0.0.40
codegen_flags: <defaults>
</compile_context>

<pallas_src>
import math

import jax
import jax.numpy as jnp
from jax.experimental import pallas as pl
from jax.experimental.pallas import tpu as pltpu


# --------------------------------------------------------------------------- #
# Kernel
# --------------------------------------------------------------------------- #
def _posenc_kernel(x_ref, pe_ref, o_ref):
    # x_ref : (TS, B*D) VMEM tile
    # pe_ref: (1,  B*D) VMEM tile, grid-invariant (stays resident in VMEM)
    # Row-broadcast add; no explicit broadcast temporary materialized.
    o_ref[...] = x_ref[...] + pe_ref[...]


# --------------------------------------------------------------------------- #
# Parameter construction (identical math to the module __init__)
# --------------------------------------------------------------------------- #
def make_positional_encoding_buffer(d_model: int, max_len: int = 5000,
                                    dtype=jnp.float32):
    """Deterministic buffer, equivalent to the registered buffer pe[:, 0, :]."""
    position = jnp.arange(max_len, dtype=jnp.float32)[:, None]            # [L, 1]
    div_term = jnp.exp(
        jnp.arange(0, d_model, 2, dtype=jnp.float32)
        * (-math.log(10000.0) / d_model))                                 # [D/2]
    ang = position * div_term                                             # [L, D/2]
    pe = jnp.zeros((max_len, d_model), dtype=jnp.float32)
    pe = pe.at[:, 0::2].set(jnp.sin(ang))
    pe = pe.at[:, 1::2].set(jnp.cos(ang))
    return pe.astype(dtype)


# --------------------------------------------------------------------------- #
# Tiling / VMEM sizing helpers
# --------------------------------------------------------------------------- #
_FALLBACK_VMEM_CAPACITY = 64 << 20  # conservative (v7x per-TC VMEM)


def _vmem_capacity_bytes() -> int:
    try:
        return int(pltpu.get_tpu_info().vmem_capacity_bytes)
    except Exception:
        return _FALLBACK_VMEM_CAPACITY


def _sublane_multiple(dtype) -> int:
    # Sub-32-bit dtypes pack rows along sublanes: 8 (f32) / 16 (bf16) / 32 (i8/fp8).
    itemsize = jnp.dtype(dtype).itemsize
    return max(8, 32 // max(itemsize, 1))


def _choose_tile_rows(S: int, row_bytes: int, vmem_capacity: int,
                      sublane: int, min_steps: int = 8) -> int:
    """Seq-axis tile size (rows of the flattened [S, B*D] layout).

    Byte-based per-tile target (measured mem-bound plateau is ~2-8 MiB), capped
    so the grid keeps >= min_steps steps (pipelining + v7x dual-TC sharding),
    aligned to the dtype's sublane packing.
    """
    # 4 double-buffered tiles (2x input + 2x output): keep the footprint ~16 MiB
    # on 64 MiB/TC parts (v7x) and ~32 MiB on 128 MiB parts (v5e/v6e).
    per_tile_target = (4 << 20) if vmem_capacity <= (64 << 20) else (8 << 20)
    ts = per_tile_target // max(row_bytes, 1)
    # Never collapse the grid: >= min_steps steps whenever the input is big
    # enough, so step i+1's input DMA overlaps step i-1's writeback and both
    # v7x TensorCores get work.
    ts = min(ts, max(1, S // min_steps))
    ts = max(sublane, (ts // sublane) * sublane)   # sublane-packing alignment
    if ts >= S:
        return S            # tiny inputs: full-extent block (always legal)
    return ts


# --------------------------------------------------------------------------- #
# Forward wrapper
# --------------------------------------------------------------------------- #
def positional_encoding_forward(x, pe):
    """x: [seq_len, batch, d_model], pe: [max_len, d_model] -> same shape as x.

    out[s, b, :] = x[s, b, :] + pe[b, :]   (faithful to the upstream module,
    which indexes pe by the batch axis after its permute).
    """
    S, B, D = x.shape
    if B > pe.shape[0]:
        raise ValueError(
            f"batch ({B}) exceeds positional table length ({pe.shape[0]})")
    pe_b = pe[:B].astype(x.dtype)                     # matches self.pe[:x.size(0)]

    # Lane-dense flattening: memory order is unchanged (pure layout plumbing).
    # B*D on the lane axis is at least as dense as any alternative layout; if
    # B*D % 128 != 0 only the final lane group of each row is masked (padding
    # would cost an extra full HBM pass, so we don't pad).
    BD = B * D
    x2d = x.reshape(S, BD)
    pe2d = pe_b.reshape(1, BD)

    itemsize = jnp.dtype(x.dtype).itemsize
    row_bytes = BD * itemsize
    capacity = _vmem_capacity_bytes()
    sublane = _sublane_multiple(x.dtype)
    ts = _choose_tile_rows(S, row_bytes, capacity, sublane)
    grid = (pl.cdiv(S, ts),)

    # 2 x-tiles + 2 out-tiles (double-buffered) + resident pe row + slack,
    # capped at physical capacity (no reliance on a bump at the 64 MiB ceiling).
    vmem_needed = 4 * ts * row_bytes + 2 * row_bytes + (2 << 20)
    vmem_limit = int(min(max(vmem_needed, 16 << 20), capacity))

    # Advisory cost: lets XLA model this as a cheap bandwidth-bound op and
    # overlap it with neighboring HLOs.
    cost = pl.CostEstimate(
        flops=S * BD,
        transcendentals=0,
        bytes_accessed=2 * S * BD * itemsize + BD * itemsize,
    )

    # NOTE: this is a 1-flop/byte streaming add; the only >1x-class lever beyond
    # tiling is fusing it into a producer/consumer (or fusing dropout here) so
    # the HBM pass is amortized.
    # TODO(synk): training-mode dropout would use pltpu.prng_seed +
    # pltpu.stateful_bernoulli inside this same kernel; eval mode (identity) is
    # what the forward pass requires and is what is implemented.
    out2d = pl.pallas_call(
        _posenc_kernel,
        out_shape=jax.ShapeDtypeStruct((S, BD), x.dtype),
        grid=grid,
        in_specs=[
            pl.BlockSpec((ts, BD), lambda i: (i, 0)),
            # Constant index_map: pe block never changes across the grid, so it
            # stays resident in VMEM (no per-step re-fetch).
            pl.BlockSpec((1, BD), lambda i: (0, 0)),
        ],
        out_specs=pl.BlockSpec((ts, BD), lambda i: (i, 0)),
        compiler_params=pltpu.CompilerParams(
            # Independent seq axis: shards across both TensorCores on v7x;
            # ~0% effect (but harmless) on single-TC v5e/v6e where HBM BW binds.
            dimension_semantics=("parallel",),
            vmem_limit_bytes=vmem_limit,
        ),
        cost_estimate=cost,
    )(x2d, pe2d)

    return out2d.reshape(S, B, D)


# --------------------------------------------------------------------------- #
# Demo / correctness check
# --------------------------------------------------------------------------- #
if __name__ == "__main__":
    seq_len, batch, d_model = 8, 2, 32
    max_len = 64

    key = jax.random.PRNGKey(0)
    x = jax.random.normal(key, (seq_len, batch, d_model), dtype=jnp.float32)

    pe = make_positional_encoding_buffer(d_model, max_len)

    out = positional_encoding_forward(x, pe)
    out = jax.block_until_ready(out)

    # Reference (pure JAX, same math as the PyTorch forward in eval mode).
    ref = jnp.transpose(
        jnp.transpose(x, (1, 0, 2)) + pe[:batch][:, None, :], (1, 0, 2))
    assert out.shape == (seq_len, batch, d_model)
    assert jnp.allclose(out, ref, atol=1e-6), "mismatch vs reference"

    print("KERNEL_OK")
</pallas_src>

<mosaic_0001>
module attributes {stable_mosaic.version = 11 : i64} {
  func.func @_posenc_kernel(%arg0: i32, %arg1: memref<8x64xf32, #tpu.memory_space<vmem>>, %arg2: memref<1x64xf32, #tpu.memory_space<vmem>>, %arg3: memref<8x64xf32, #tpu.memory_space<vmem>>) attributes {dimension_semantics = [#tpu.dimension_semantics<parallel>], iteration_bounds = array<i64: 1>, scalar_prefetch = 0 : i64, scratch_operands = 0 : i64, tpu.core_type = #tpu.core_type<tc>, window_params = [{transform_indices = @transform_0, window_bounds = array<i64: 8, 64>}, {pipeline_mode = #tpu.pipeline_mode<synchronous>, transform_indices = @transform_1, window_bounds = array<i64: 1, 64>}, {transform_indices = @transform_2, window_bounds = array<i64: 8, 64>}]} {
    %c0 = arith.constant 0 : index
    %c0_0 = arith.constant 0 : index
    %0 = vector.load %arg1[%c0, %c0_0] : memref<8x64xf32, #tpu.memory_space<vmem>>, vector<8x64xf32>
    %c0_1 = arith.constant 0 : index
    %c0_2 = arith.constant 0 : index
    %1 = vector.load %arg2[%c0_1, %c0_2] : memref<1x64xf32, #tpu.memory_space<vmem>>, vector<1x64xf32>
    %2 = vector.broadcast %1 : vector<1x64xf32> to vector<8x64xf32>
    %3 = arith.addf %0, %2 : vector<8x64xf32>
    %c0_3 = arith.constant 0 : index
    %c0_4 = arith.constant 0 : index
    %4 = vector.load %arg3[%c0_3, %c0_4] : memref<8x64xf32, #tpu.memory_space<vmem>>, vector<8x64xf32>
    tpu.vector_store %arg3[%c0_3, %c0_4], %3 {strides = array<i32>} : memref<8x64xf32, #tpu.memory_space<vmem>>, vector<8x64xf32>,
    return
  }
  func.func @transform_0(%arg0: i32) -> (i32, i32) {
    %c0_i32 = arith.constant 0 : i32
    %c0_i32_0 = arith.constant 0 : i32
    return %arg0, %c0_i32 : i32, i32
  }
  func.func @transform_1(%arg0: i32) -> (i32, i32) {
    %c0_i32 = arith.constant 0 : i32
    %c0_i32_0 = arith.constant 0 : i32
    %c0_i32_1 = arith.constant 0 : i32
    return %c0_i32, %c0_i32_0 : i32, i32
  }
  func.func @transform_2(%arg0: i32) -> (i32, i32) {
    %c0_i32 = arith.constant 0 : i32
    %c0_i32_0 = arith.constant 0 : i32
    return %arg0, %c0_i32 : i32, i32
  }
}

</mosaic_0001>

<llo_original>
// kernel: tpu_custom_call.1
$region0: #{tpu_custom_call.1}
  #allocation0 [shape = 'u32[]', space=smem, size = 0x4, offset = 0x4, fixed_abs, tag = 'smem constant byte address 0x4 - core index']
  #allocation1 [shape = 'u32[144,128]{1,0:T(1,128)}', space=vmem, size = 0x12000, scoped, tag = 'internal scratch']
  %s0 = inlined_call_operand.hbm [shape: f32[8,64], index: 0, kind: input, shape index: {}]
  %s1 = inlined_call_operand.vmem [shape: f32[1,64], index: 1, kind: input, shape index: {}]
  %s2 = inlined_call_operand.hbm [shape: f32[8,64], index: 2, kind: output, shape index: {}]
  %s3 = sld [smem:[#allocation0]]
  $region22: #{tpu_custom_call.1} parent=0
    _
  %s5 = ssub.s32 1, %s3
  %s6 = scalar_select 0, %s5, %s3
  $region1: #{tpu_custom_call.1} parent=0
    #allocation2 [shape = 'u8[4096]{0}', space=vmem, size = 0x1000, scoped, tag = 'input window, operand 0, single buffered']
    #allocation3 [shape = 's32[1]{0}', space=sflag, size = 0x4, scoped, tag = 'scoped memory for tpu_custom_call.1']
    #allocation4 [shape = 's32[1]{0}', space=sflag, size = 0x4, scoped, tag = 'scoped memory for tpu_custom_call.1']
    #allocation5 [shape = 'u8[4096]{0}', space=vmem, size = 0x1000, scoped, tag = 'output window, operand 0, single buffered']
    %7 = vsyncpa [#allocation3], 0
    %8 = vsyncpa [#allocation4], 0
    // Predicated region
    $region2: #{tpu_custom_call.1} parent=1 // pred_check
      _
    $region3: #{tpu_custom_call.1} parent=1 // pred_check_branch
      %10 = sbr.rel (0) target = $region5
    $region4: #{tpu_custom_call.1} parent=1 // pred_region
      %s12 = ssub.s32 128, 128
      %13 = vsyncadd [#allocation3], %s12
      %s15 = sshll.u32 [#allocation2], 4
      %s16 = int_to_ptr.vmem [resolvable:$true] %s15
      %18 = dma.hbm_to_vmem [thread:$0]  %s0, 128, %s16, [#allocation3]
    $region5: #{tpu_custom_call.1} parent=1 // pred_fallthru
      _
    // Predicated region
    $region6: #{tpu_custom_call.1} parent=1 // pred_check
      _
    $region7: #{tpu_custom_call.1} parent=1 // pred_check_branch
      %20 = sbr.rel (0) target = $region9
    $region8: #{tpu_custom_call.1} parent=1 // pred_region
      _
    $region9: #{tpu_custom_call.1} parent=1 // pred_fallthru
      _
    // Predicated region
    $region10: #{tpu_custom_call.1} parent=1 // pred_check
      _
    $region11: #{tpu_custom_call.1} parent=1 // pred_check_branch
      %22 = sbr.rel (0) target = $region13
    $region12: #{tpu_custom_call.1} parent=1 // pred_region
      %23 = dma.done [#allocation3], 128
    $region13: #{tpu_custom_call.1} parent=1 // pred_fallthru
      _
    %v24 = vld [vmem:[#allocation2] sm:$0xff]
    %v25 = vld [vmem:[%s1] sm:$0x1]
    %v27 = vlaneseq
    %v28 = vshrl.u32 %v27, 7
    %v29 = vsub.s32 0, %v28
    %v30 = vrot.slane %v25, %v29
    %v32 = vadd.f32 %v24, %v30
    %vm33 = vcmask 523264
    %34 = vst.msk [vmem:[#allocation5] sm:$0xff] %vm33, %v32
    // Predicated region
    $region14: #{tpu_custom_call.1} parent=1 // pred_check
      _
    $region15: #{tpu_custom_call.1} parent=1 // pred_check_branch
      %36 = sbr.rel (0) target = $region17
    $region16: #{tpu_custom_call.1} parent=1 // pred_region
      %s38 = ssub.s32 128, 128
      %39 = vsyncadd [#allocation4], %s38
      %s41 = sshll.u32 [#allocation5], 4
      %s42 = int_to_ptr.vmem [resolvable:$true] %s41
      %44 = dma.vmem_to_hbm [thread:$0]  %s42, 128, %s2, [#allocation4]
    $region17: #{tpu_custom_call.1} parent=1 // pred_fallthru
      _
    // Predicated region
    $region18: #{tpu_custom_call.1} parent=1 // pred_check
      _
    $region19: #{tpu_custom_call.1} parent=1 // pred_check_branch
      %46 = sbr.rel (0) target = $region21
    $region20: #{tpu_custom_call.1} parent=1 // pred_region
      %47 = dma.done [#allocation4], 128
    $region21: #{tpu_custom_call.1} parent=1 // pred_fallthru
      _
    %48 = vsyncpa [#allocation3], 1
    %49 = vsyncpa [#allocation4], 1

</llo_original>
